<compile_context>
chip_gen: v7x
topology: tpu7x:2x2x1
jax: 0.10.0
libtpu: 0.0.40
codegen_flags: <defaults>
</compile_context>

<pallas_src>
import jax
import jax.numpy as jnp
from jax.experimental import pallas as pl
from jax.experimental.pallas import tpu as pltpu


TILE_B = 512  # lanes per grid step (multiple of 128); <1 MiB of VMEM per step


def comparenet_kernel(x_ref, w1_ref, b1_ref, w2_ref, b2_ref, w3_ref, b3_ref,
                      o_ref):
    # x_ref: [2, TILE_B]   (features on sublanes, batch on lanes)
    # w1: [16, 2]  b1: [16, 1]
    # w2: [8, 16]  b2: [8, 1]
    # w3: [1, 8]   b3: [1, 1]
    x = x_ref[...]
    w1 = w1_ref[...]
    w2 = w2_ref[...]
    w3 = w3_ref[...]

    # --- fcr1 + ReLU: h1[o, b] = relu(sum_i w1[o, i] * x[i, b] + b1[o]) ---
    acc1 = w1[:, 0:1] * x[0:1, :]                    # [16, TILE_B]
    acc1 = acc1 + w1[:, 1:2] * x[1:2, :]
    h1 = jnp.maximum(acc1 + b1_ref[...], 0.0)        # [16, TILE_B]

    # --- fcr2 + ReLU: unrolled VPU MAC over 16 input features ---
    acc2 = w2[:, 0:1] * h1[0:1, :]                   # [8, TILE_B]
    for i in range(1, 16):
        acc2 = acc2 + w2[:, i:i + 1] * h1[i:i + 1, :]
    h2 = jnp.maximum(acc2 + b2_ref[...], 0.0)        # [8, TILE_B]

    # --- fc3 (no activation): unrolled over 8 input features ---
    acc3 = w3[:, 0:1] * h2[0:1, :]                   # [1, TILE_B]
    for i in range(1, 8):
        acc3 = acc3 + w3[:, i:i + 1] * h2[i:i + 1, :]
    out = acc3 + b3_ref[...]                         # [1, TILE_B] lane-dense

    o_ref[...] = out.astype(o_ref.dtype)


def comparenet_forward(x, params, *, tile_b=TILE_B):
    """x: [B, 2] float32; params: PyTorch-layout weights (out,in) / biases (out,1)."""
    w1, b1 = params["w1"], params["b1"]
    w2, b2 = params["w2"], params["b2"]
    w3, b3 = params["w3"], params["b3"]

    B = x.shape[0]
    xt = x.T                                           # [2, B] batch-in-lanes
    n_tiles = pl.cdiv(B, tile_b)
    b_pad = n_tiles * tile_b
    if b_pad != B:
        xt = jnp.pad(xt, ((0, 0), (0, b_pad - B)))

    # Weights/biases: constant block index -> resident in VMEM across all steps.
    resident = lambda a: pl.BlockSpec(a.shape, lambda i: (0, 0))

    out_t = pl.pallas_call(
        comparenet_kernel,
        out_shape=jax.ShapeDtypeStruct((1, b_pad), jnp.float32),
        grid=(n_tiles,),
        in_specs=[
            pl.BlockSpec((2, tile_b), lambda i: (0, i)),   # x streams
            resident(w1), resident(b1),
            resident(w2), resident(b2),
            resident(w3), resident(b3),
        ],
        out_specs=pl.BlockSpec((1, tile_b), lambda i: (0, i)),  # lane-dense out
        compiler_params=pltpu.CompilerParams(
            dimension_semantics=("parallel",)),
    )(xt, w1, b1, w2, b2, w3, b3)

    # [1, b_pad] -> [B, 1]
    return out_t[:, :B].T


def init_params(key):
    """Deterministic init mimicking nn.Linear (weights stored (out, in))."""
    ks = jax.random.split(key, 6)

    def linear(kw, kb, fan_in, fan_out):
        bound = 1.0 / jnp.sqrt(fan_in)
        w = jax.random.uniform(kw, (fan_out, fan_in), jnp.float32,
                               minval=-bound, maxval=bound)
        b = jax.random.uniform(kb, (fan_out, 1), jnp.float32,
                               minval=-bound, maxval=bound)
        return w, b

    w1, b1 = linear(ks[0], ks[1], 2, 16)    # fcr1
    w2, b2 = linear(ks[2], ks[3], 16, 8)    # fcr2
    w3, b3 = linear(ks[4], ks[5], 8, 1)     # fc3
    return {"w1": w1, "b1": b1, "w2": w2, "b2": b2, "w3": w3, "b3": b3}


def reference_forward(x, p):
    h1 = jnp.maximum(x @ p["w1"].T + p["b1"].T, 0.0)
    h2 = jnp.maximum(h1 @ p["w2"].T + p["b2"].T, 0.0)
    return h2 @ p["w3"].T + p["b3"].T


if __name__ == "__main__":
    key = jax.random.PRNGKey(0)
    kx, kp = jax.random.split(key)

    batch = 8
    x = jax.random.normal(kx, (batch, 2), jnp.float32)
    params = init_params(kp)

    out = comparenet_forward(x, params)
    out = jax.block_until_ready(out)

    ref = reference_forward(x, params)
    assert out.shape == (batch, 1), out.shape
    assert jnp.allclose(out, ref, atol=1e-5, rtol=1e-5), (out, ref)

    print("KERNEL_OK")
</pallas_src>

<mosaic_0001>
module attributes {stable_mosaic.version = 11 : i64} {
  func.func @comparenet_kernel(%arg0: i32, %arg1: memref<2x512xf32, #tpu.memory_space<vmem>>, %arg2: memref<16x2xf32, #tpu.memory_space<vmem>>, %arg3: memref<16x1xf32, #tpu.memory_space<vmem>>, %arg4: memref<8x16xf32, #tpu.memory_space<vmem>>, %arg5: memref<8x1xf32, #tpu.memory_space<vmem>>, %arg6: memref<1x8xf32, #tpu.memory_space<vmem>>, %arg7: memref<1x1xf32, #tpu.memory_space<vmem>>, %arg8: memref<1x512xf32, #tpu.memory_space<vmem>>) attributes {dimension_semantics = [#tpu.dimension_semantics<parallel>], iteration_bounds = array<i64: 1>, scalar_prefetch = 0 : i64, scratch_operands = 0 : i64, tpu.core_type = #tpu.core_type<tc>, window_params = [{transform_indices = @transform_0, window_bounds = array<i64: 2, 512>}, {pipeline_mode = #tpu.pipeline_mode<synchronous>, transform_indices = @transform_1, window_bounds = array<i64: 16, 2>}, {pipeline_mode = #tpu.pipeline_mode<synchronous>, transform_indices = @transform_2, window_bounds = array<i64: 16, 1>}, {pipeline_mode = #tpu.pipeline_mode<synchronous>, transform_indices = @transform_3, window_bounds = array<i64: 8, 16>}, {pipeline_mode = #tpu.pipeline_mode<synchronous>, transform_indices = @transform_4, window_bounds = array<i64: 8, 1>}, {pipeline_mode = #tpu.pipeline_mode<synchronous>, transform_indices = @transform_5, window_bounds = array<i64: 1, 8>}, {pipeline_mode = #tpu.pipeline_mode<synchronous>, transform_indices = @transform_6, window_bounds = array<i64: 1, 1>}, {transform_indices = @transform_7, window_bounds = array<i64: 1, 512>}]} {
    %c0 = arith.constant 0 : index
    %c0_0 = arith.constant 0 : index
    %0 = vector.load %arg1[%c0, %c0_0] : memref<2x512xf32, #tpu.memory_space<vmem>>, vector<2x512xf32>
    %c0_1 = arith.constant 0 : index
    %c0_2 = arith.constant 0 : index
    %1 = vector.load %arg2[%c0_1, %c0_2] : memref<16x2xf32, #tpu.memory_space<vmem>>, vector<16x2xf32>
    %c0_3 = arith.constant 0 : index
    %c0_4 = arith.constant 0 : index
    %2 = vector.load %arg4[%c0_3, %c0_4] : memref<8x16xf32, #tpu.memory_space<vmem>>, vector<8x16xf32>
    %c0_5 = arith.constant 0 : index
    %c0_6 = arith.constant 0 : index
    %3 = vector.load %arg6[%c0_5, %c0_6] : memref<1x8xf32, #tpu.memory_space<vmem>>, vector<1x8xf32>
    %4 = vector.extract_strided_slice %1 {offsets = [0, 0], sizes = [16, 1], strides = [1, 1]} : vector<16x2xf32> to vector<16x1xf32>
    %5 = vector.extract_strided_slice %0 {offsets = [0, 0], sizes = [1, 512], strides = [1, 1]} : vector<2x512xf32> to vector<1x512xf32>
    %6 = vector.broadcast %4 : vector<16x1xf32> to vector<16x512xf32>
    %7 = vector.broadcast %5 : vector<1x512xf32> to vector<16x512xf32>
    %8 = arith.mulf %6, %7 : vector<16x512xf32>
    %9 = vector.extract_strided_slice %1 {offsets = [0, 1], sizes = [16, 1], strides = [1, 1]} : vector<16x2xf32> to vector<16x1xf32>
    %10 = vector.extract_strided_slice %0 {offsets = [1, 0], sizes = [1, 512], strides = [1, 1]} : vector<2x512xf32> to vector<1x512xf32>
    %11 = vector.broadcast %9 : vector<16x1xf32> to vector<16x512xf32>
    %12 = vector.broadcast %10 : vector<1x512xf32> to vector<16x512xf32>
    %13 = arith.mulf %11, %12 : vector<16x512xf32>
    %14 = arith.addf %8, %13 : vector<16x512xf32>
    %c0_7 = arith.constant 0 : index
    %c0_8 = arith.constant 0 : index
    %15 = vector.load %arg3[%c0_7, %c0_8] : memref<16x1xf32, #tpu.memory_space<vmem>>, vector<16x1xf32>
    %16 = vector.broadcast %15 : vector<16x1xf32> to vector<16x512xf32>
    %17 = arith.addf %14, %16 : vector<16x512xf32>
    %cst = arith.constant 0.000000e+00 : f32
    %18 = vector.broadcast %cst : f32 to vector<16x512xf32>
    %19 = arith.maximumf %17, %18 : vector<16x512xf32>
    %20 = vector.extract_strided_slice %2 {offsets = [0, 0], sizes = [8, 1], strides = [1, 1]} : vector<8x16xf32> to vector<8x1xf32>
    %21 = vector.extract_strided_slice %19 {offsets = [0, 0], sizes = [1, 512], strides = [1, 1]} : vector<16x512xf32> to vector<1x512xf32>
    %22 = vector.broadcast %20 : vector<8x1xf32> to vector<8x512xf32>
    %23 = vector.broadcast %21 : vector<1x512xf32> to vector<8x512xf32>
    %24 = arith.mulf %22, %23 : vector<8x512xf32>
    %25 = vector.extract_strided_slice %2 {offsets = [0, 1], sizes = [8, 1], strides = [1, 1]} : vector<8x16xf32> to vector<8x1xf32>
    %26 = vector.extract_strided_slice %19 {offsets = [1, 0], sizes = [1, 512], strides = [1, 1]} : vector<16x512xf32> to vector<1x512xf32>
    %27 = vector.broadcast %25 : vector<8x1xf32> to vector<8x512xf32>
    %28 = vector.broadcast %26 : vector<1x512xf32> to vector<8x512xf32>
    %29 = arith.mulf %27, %28 : vector<8x512xf32>
    %30 = arith.addf %24, %29 : vector<8x512xf32>
    %31 = vector.extract_strided_slice %2 {offsets = [0, 2], sizes = [8, 1], strides = [1, 1]} : vector<8x16xf32> to vector<8x1xf32>
    %32 = vector.extract_strided_slice %19 {offsets = [2, 0], sizes = [1, 512], strides = [1, 1]} : vector<16x512xf32> to vector<1x512xf32>
    %33 = vector.broadcast %31 : vector<8x1xf32> to vector<8x512xf32>
    %34 = vector.broadcast %32 : vector<1x512xf32> to vector<8x512xf32>
    %35 = arith.mulf %33, %34 : vector<8x512xf32>
    %36 = arith.addf %30, %35 : vector<8x512xf32>
    %37 = vector.extract_strided_slice %2 {offsets = [0, 3], sizes = [8, 1], strides = [1, 1]} : vector<8x16xf32> to vector<8x1xf32>
    %38 = vector.extract_strided_slice %19 {offsets = [3, 0], sizes = [1, 512], strides = [1, 1]} : vector<16x512xf32> to vector<1x512xf32>
    %39 = vector.broadcast %37 : vector<8x1xf32> to vector<8x512xf32>
    %40 = vector.broadcast %38 : vector<1x512xf32> to vector<8x512xf32>
    %41 = arith.mulf %39, %40 : vector<8x512xf32>
    %42 = arith.addf %36, %41 : vector<8x512xf32>
    %43 = vector.extract_strided_slice %2 {offsets = [0, 4], sizes = [8, 1], strides = [1, 1]} : vector<8x16xf32> to vector<8x1xf32>
    %44 = vector.extract_strided_slice %19 {offsets = [4, 0], sizes = [1, 512], strides = [1, 1]} : vector<16x512xf32> to vector<1x512xf32>
    %45 = vector.broadcast %43 : vector<8x1xf32> to vector<8x512xf32>
    %46 = vector.broadcast %44 : vector<1x512xf32> to vector<8x512xf32>
    %47 = arith.mulf %45, %46 : vector<8x512xf32>
    %48 = arith.addf %42, %47 : vector<8x512xf32>
    %49 = vector.extract_strided_slice %2 {offsets = [0, 5], sizes = [8, 1], strides = [1, 1]} : vector<8x16xf32> to vector<8x1xf32>
    %50 = vector.extract_strided_slice %19 {offsets = [5, 0], sizes = [1, 512], strides = [1, 1]} : vector<16x512xf32> to vector<1x512xf32>
    %51 = vector.broadcast %49 : vector<8x1xf32> to vector<8x512xf32>
    %52 = vector.broadcast %50 : vector<1x512xf32> to vector<8x512xf32>
    %53 = arith.mulf %51, %52 : vector<8x512xf32>
    %54 = arith.addf %48, %53 : vector<8x512xf32>
    %55 = vector.extract_strided_slice %2 {offsets = [0, 6], sizes = [8, 1], strides = [1, 1]} : vector<8x16xf32> to vector<8x1xf32>
    %56 = vector.extract_strided_slice %19 {offsets = [6, 0], sizes = [1, 512], strides = [1, 1]} : vector<16x512xf32> to vector<1x512xf32>
    %57 = vector.broadcast %55 : vector<8x1xf32> to vector<8x512xf32>
    %58 = vector.broadcast %56 : vector<1x512xf32> to vector<8x512xf32>
    %59 = arith.mulf %57, %58 : vector<8x512xf32>
    %60 = arith.addf %54, %59 : vector<8x512xf32>
    %61 = vector.extract_strided_slice %2 {offsets = [0, 7], sizes = [8, 1], strides = [1, 1]} : vector<8x16xf32> to vector<8x1xf32>
    %62 = vector.extract_strided_slice %19 {offsets = [7, 0], sizes = [1, 512], strides = [1, 1]} : vector<16x512xf32> to vector<1x512xf32>
    %63 = vector.broadcast %61 : vector<8x1xf32> to vector<8x512xf32>
    %64 = vector.broadcast %62 : vector<1x512xf32> to vector<8x512xf32>
    %65 = arith.mulf %63, %64 : vector<8x512xf32>
    %66 = arith.addf %60, %65 : vector<8x512xf32>
    %67 = vector.extract_strided_slice %2 {offsets = [0, 8], sizes = [8, 1], strides = [1, 1]} : vector<8x16xf32> to vector<8x1xf32>
    %68 = vector.extract_strided_slice %19 {offsets = [8, 0], sizes = [1, 512], strides = [1, 1]} : vector<16x512xf32> to vector<1x512xf32>
    %69 = vector.broadcast %67 : vector<8x1xf32> to vector<8x512xf32>
    %70 = vector.broadcast %68 : vector<1x512xf32> to vector<8x512xf32>
    %71 = arith.mulf %69, %70 : vector<8x512xf32>
    %72 = arith.addf %66, %71 : vector<8x512xf32>
    %73 = vector.extract_strided_slice %2 {offsets = [0, 9], sizes = [8, 1], strides = [1, 1]} : vector<8x16xf32> to vector<8x1xf32>
    %74 = vector.extract_strided_slice %19 {offsets = [9, 0], sizes = [1, 512], strides = [1, 1]} : vector<16x512xf32> to vector<1x512xf32>
    %75 = vector.broadcast %73 : vector<8x1xf32> to vector<8x512xf32>
    %76 = vector.broadcast %74 : vector<1x512xf32> to vector<8x512xf32>
    %77 = arith.mulf %75, %76 : vector<8x512xf32>
    %78 = arith.addf %72, %77 : vector<8x512xf32>
    %79 = vector.extract_strided_slice %2 {offsets = [0, 10], sizes = [8, 1], strides = [1, 1]} : vector<8x16xf32> to vector<8x1xf32>
    %80 = vector.extract_strided_slice %19 {offsets = [10, 0], sizes = [1, 512], strides = [1, 1]} : vector<16x512xf32> to vector<1x512xf32>
    %81 = vector.broadcast %79 : vector<8x1xf32> to vector<8x512xf32>
    %82 = vector.broadcast %80 : vector<1x512xf32> to vector<8x512xf32>
    %83 = arith.mulf %81, %82 : vector<8x512xf32>
    %84 = arith.addf %78, %83 : vector<8x512xf32>
    %85 = vector.extract_strided_slice %2 {offsets = [0, 11], sizes = [8, 1], strides = [1, 1]} : vector<8x16xf32> to vector<8x1xf32>
    %86 = vector.extract_strided_slice %19 {offsets = [11, 0], sizes = [1, 512], strides = [1, 1]} : vector<16x512xf32> to vector<1x512xf32>
    %87 = vector.broadcast %85 : vector<8x1xf32> to vector<8x512xf32>
    %88 = vector.broadcast %86 : vector<1x512xf32> to vector<8x512xf32>
    %89 = arith.mulf %87, %88 : vector<8x512xf32>
    %90 = arith.addf %84, %89 : vector<8x512xf32>
    %91 = vector.extract_strided_slice %2 {offsets = [0, 12], sizes = [8, 1], strides = [1, 1]} : vector<8x16xf32> to vector<8x1xf32>
    %92 = vector.extract_strided_slice %19 {offsets = [12, 0], sizes = [1, 512], strides = [1, 1]} : vector<16x512xf32> to vector<1x512xf32>
    %93 = vector.broadcast %91 : vector<8x1xf32> to vector<8x512xf32>
    %94 = vector.broadcast %92 : vector<1x512xf32> to vector<8x512xf32>
    %95 = arith.mulf %93, %94 : vector<8x512xf32>
    %96 = arith.addf %90, %95 : vector<8x512xf32>
    %97 = vector.extract_strided_slice %2 {offsets = [0, 13], sizes = [8, 1], strides = [1, 1]} : vector<8x16xf32> to vector<8x1xf32>
    %98 = vector.extract_strided_slice %19 {offsets = [13, 0], sizes = [1, 512], strides = [1, 1]} : vector<16x512xf32> to vector<1x512xf32>
    %99 = vector.broadcast %97 : vector<8x1xf32> to vector<8x512xf32>
    %100 = vector.broadcast %98 : vector<1x512xf32> to vector<8x512xf32>
    %101 = arith.mulf %99, %100 : vector<8x512xf32>
    %102 = arith.addf %96, %101 : vector<8x512xf32>
    %103 = vector.extract_strided_slice %2 {offsets = [0, 14], sizes = [8, 1], strides = [1, 1]} : vector<8x16xf32> to vector<8x1xf32>
    %104 = vector.extract_strided_slice %19 {offsets = [14, 0], sizes = [1, 512], strides = [1, 1]} : vector<16x512xf32> to vector<1x512xf32>
    %105 = vector.broadcast %103 : vector<8x1xf32> to vector<8x512xf32>
    %106 = vector.broadcast %104 : vector<1x512xf32> to vector<8x512xf32>
    %107 = arith.mulf %105, %106 : vector<8x512xf32>
    %108 = arith.addf %102, %107 : vector<8x512xf32>
    %109 = vector.extract_strided_slice %2 {offsets = [0, 15], sizes = [8, 1], strides = [1, 1]} : vector<8x16xf32> to vector<8x1xf32>
    %110 = vector.extract_strided_slice %19 {offsets = [15, 0], sizes = [1, 512], strides = [1, 1]} : vector<16x512xf32> to vector<1x512xf32>
    %111 = vector.broadcast %109 : vector<8x1xf32> to vector<8x512xf32>
    %112 = vector.broadcast %110 : vector<1x512xf32> to vector<8x512xf32>
    %113 = arith.mulf %111, %112 : vector<8x512xf32>
    %114 = arith.addf %108, %113 : vector<8x512xf32>
    %c0_9 = arith.constant 0 : index
    %c0_10 = arith.constant 0 : index
    %115 = vector.load %arg5[%c0_9, %c0_10] : memref<8x1xf32, #tpu.memory_space<vmem>>, vector<8x1xf32>
    %116 = vector.broadcast %115 : vector<8x1xf32> to vector<8x512xf32>
    %117 = arith.addf %114, %116 : vector<8x512xf32>
    %cst_11 = arith.constant 0.000000e+00 : f32
    %118 = vector.broadcast %cst_11 : f32 to vector<8x512xf32>
    %119 = arith.maximumf %117, %118 : vector<8x512xf32>
    %120 = vector.extract_strided_slice %3 {offsets = [0, 0], sizes = [1, 1], strides = [1, 1]} : vector<1x8xf32> to vector<1x1xf32>
    %121 = vector.extract_strided_slice %119 {offsets = [0, 0], sizes = [1, 512], strides = [1, 1]} : vector<8x512xf32> to vector<1x512xf32>
    %122 = vector.broadcast %120 : vector<1x1xf32> to vector<1x512xf32>
    %123 = arith.mulf %122, %121 : vector<1x512xf32>
    %124 = vector.extract_strided_slice %3 {offsets = [0, 1], sizes = [1, 1], strides = [1, 1]} : vector<1x8xf32> to vector<1x1xf32>
    %125 = vector.extract_strided_slice %119 {offsets = [1, 0], sizes = [1, 512], strides = [1, 1]} : vector<8x512xf32> to vector<1x512xf32>
    %126 = vector.broadcast %124 : vector<1x1xf32> to vector<1x512xf32>
    %127 = arith.mulf %126, %125 : vector<1x512xf32>
    %128 = arith.addf %123, %127 : vector<1x512xf32>
    %129 = vector.extract_strided_slice %3 {offsets = [0, 2], sizes = [1, 1], strides = [1, 1]} : vector<1x8xf32> to vector<1x1xf32>
    %130 = vector.extract_strided_slice %119 {offsets = [2, 0], sizes = [1, 512], strides = [1, 1]} : vector<8x512xf32> to vector<1x512xf32>
    %131 = vector.broadcast %129 : vector<1x1xf32> to vector<1x512xf32>
    %132 = arith.mulf %131, %130 : vector<1x512xf32>
    %133 = arith.addf %128, %132 : vector<1x512xf32>
    %134 = vector.extract_strided_slice %3 {offsets = [0, 3], sizes = [1, 1], strides = [1, 1]} : vector<1x8xf32> to vector<1x1xf32>
    %135 = vector.extract_strided_slice %119 {offsets = [3, 0], sizes = [1, 512], strides = [1, 1]} : vector<8x512xf32> to vector<1x512xf32>
    %136 = vector.broadcast %134 : vector<1x1xf32> to vector<1x512xf32>
    %137 = arith.mulf %136, %135 : vector<1x512xf32>
    %138 = arith.addf %133, %137 : vector<1x512xf32>
    %139 = vector.extract_strided_slice %3 {offsets = [0, 4], sizes = [1, 1], strides = [1, 1]} : vector<1x8xf32> to vector<1x1xf32>
    %140 = vector.extract_strided_slice %119 {offsets = [4, 0], sizes = [1, 512], strides = [1, 1]} : vector<8x512xf32> to vector<1x512xf32>
    %141 = vector.broadcast %139 : vector<1x1xf32> to vector<1x512xf32>
    %142 = arith.mulf %141, %140 : vector<1x512xf32>
    %143 = arith.addf %138, %142 : vector<1x512xf32>
    %144 = vector.extract_strided_slice %3 {offsets = [0, 5], sizes = [1, 1], strides = [1, 1]} : vector<1x8xf32> to vector<1x1xf32>
    %145 = vector.extract_strided_slice %119 {offsets = [5, 0], sizes = [1, 512], strides = [1, 1]} : vector<8x512xf32> to vector<1x512xf32>
    %146 = vector.broadcast %144 : vector<1x1xf32> to vector<1x512xf32>
    %147 = arith.mulf %146, %145 : vector<1x512xf32>
    %148 = arith.addf %143, %147 : vector<1x512xf32>
    %149 = vector.extract_strided_slice %3 {offsets = [0, 6], sizes = [1, 1], strides = [1, 1]} : vector<1x8xf32> to vector<1x1xf32>
    %150 = vector.extract_strided_slice %119 {offsets = [6, 0], sizes = [1, 512], strides = [1, 1]} : vector<8x512xf32> to vector<1x512xf32>
    %151 = vector.broadcast %149 : vector<1x1xf32> to vector<1x512xf32>
    %152 = arith.mulf %151, %150 : vector<1x512xf32>
    %153 = arith.addf %148, %152 : vector<1x512xf32>
    %154 = vector.extract_strided_slice %3 {offsets = [0, 7], sizes = [1, 1], strides = [1, 1]} : vector<1x8xf32> to vector<1x1xf32>
    %155 = vector.extract_strided_slice %119 {offsets = [7, 0], sizes = [1, 512], strides = [1, 1]} : vector<8x512xf32> to vector<1x512xf32>
    %156 = vector.broadcast %154 : vector<1x1xf32> to vector<1x512xf32>
    %157 = arith.mulf %156, %155 : vector<1x512xf32>
    %158 = arith.addf %153, %157 : vector<1x512xf32>
    %c0_12 = arith.constant 0 : index
    %c0_13 = arith.constant 0 : index
    %159 = vector.load %arg7[%c0_12, %c0_13] : memref<1x1xf32, #tpu.memory_space<vmem>>, vector<1x1xf32>
    %160 = vector.broadcast %159 : vector<1x1xf32> to vector<1x512xf32>
    %161 = arith.addf %158, %160 : vector<1x512xf32>
    %c0_14 = arith.constant 0 : index
    %c0_15 = arith.constant 0 : index
    %162 = vector.load %arg8[%c0_14, %c0_15] : memref<1x512xf32, #tpu.memory_space<vmem>>, vector<1x512xf32>
    tpu.vector_store %arg8[%c0_14, %c0_15], %161 {strides = array<i32>} : memref<1x512xf32, #tpu.memory_space<vmem>>, vector<1x512xf32>,
    return
  }
  func.func @transform_0(%arg0: i32) -> (i32, i32) {
    %c0_i32 = arith.constant 0 : i32
    %c0_i32_0 = arith.constant 0 : i32
    return %c0_i32, %arg0 : i32, i32
  }
  func.func @transform_1(%arg0: i32) -> (i32, i32) {
    %c0_i32 = arith.constant 0 : i32
    %c0_i32_0 = arith.constant 0 : i32
    %c0_i32_1 = arith.constant 0 : i32
    return %c0_i32, %c0_i32_0 : i32, i32
  }
  func.func @transform_2(%arg0: i32) -> (i32, i32) {
    %c0_i32 = arith.constant 0 : i32
    %c0_i32_0 = arith.constant 0 : i32
    %c0_i32_1 = arith.constant 0 : i32
    return %c0_i32, %c0_i32_0 : i32, i32
  }
  func.func @transform_3(%arg0: i32) -> (i32, i32) {
    %c0_i32 = arith.constant 0 : i32
    %c0_i32_0 = arith.constant 0 : i32
    %c0_i32_1 = arith.constant 0 : i32
    return %c0_i32, %c0_i32_0 : i32, i32
  }
  func.func @transform_4(%arg0: i32) -> (i32, i32) {
    %c0_i32 = arith.constant 0 : i32
    %c0_i32_0 = arith.constant 0 : i32
    %c0_i32_1 = arith.constant 0 : i32
    return %c0_i32, %c0_i32_0 : i32, i32
  }
  func.func @transform_5(%arg0: i32) -> (i32, i32) {
    %c0_i32 = arith.constant 0 : i32
    %c0_i32_0 = arith.constant 0 : i32
    %c0_i32_1 = arith.constant 0 : i32
    return %c0_i32, %c0_i32_0 : i32, i32
  }
  func.func @transform_6(%arg0: i32) -> (i32, i32) {
    %c0_i32 = arith.constant 0 : i32
    %c0_i32_0 = arith.constant 0 : i32
    %c0_i32_1 = arith.constant 0 : i32
    return %c0_i32, %c0_i32_0 : i32, i32
  }
  func.func @transform_7(%arg0: i32) -> (i32, i32) {
    %c0_i32 = arith.constant 0 : i32
    %c0_i32_0 = arith.constant 0 : i32
    return %c0_i32, %arg0 : i32, i32
  }
}

</mosaic_0001>

<llo_original>
// kernel: tpu_custom_call.1
$region0: #{tpu_custom_call.1}
  #allocation0 [shape = 'u32[]', space=smem, size = 0x4, offset = 0x4, fixed_abs, tag = 'smem constant byte address 0x4 - core index']
  #allocation1 [shape = 'u32[144,128]{1,0:T(1,128)}', space=vmem, size = 0x12000, scoped, tag = 'internal scratch']
  #allocation2 [shape = 'f32[1,1]{1,0:T(1,128)S(1)}', space=vmem, size = 0x200, scoped, tag = 'scoped memory for tpu_custom_call.1']
  %s0 = inlined_call_operand.vmem [shape: f32[2,512], index: 0, kind: input, shape index: {}]
  %s1 = inlined_call_operand.vmem [shape: f32[16,2], index: 1, kind: input, shape index: {}]
  %s2 = inlined_call_operand.vmem [shape: f32[16,1], index: 2, kind: input, shape index: {}]
  %s3 = inlined_call_operand.vmem [shape: f32[8,16], index: 3, kind: input, shape index: {}]
  %s4 = inlined_call_operand.vmem [shape: f32[8,1], index: 4, kind: input, shape index: {}]
  %s5 = inlined_call_operand.vmem [shape: f32[1,8], index: 5, kind: input, shape index: {}]
  %s6 = inlined_call_operand.<no memory space> [shape: f32[1,1], index: 6, kind: input, shape index: {}]
  %s7 = inlined_call_operand.hbm [shape: f32[1,512], index: 7, kind: output, shape index: {}]
  %s8 = sld [smem:[#allocation0]]
  $region38: #{tpu_custom_call.1} parent=0
    _
  %s10 = ssub.s32 1, %s8
  %s11 = scalar_select 0, %s10, %s8
  %v12 = vstv %s6
  %13 = vst [vmem:[#allocation2] sm:$0x1] %v12
  $region1: #{tpu_custom_call.1} parent=0
    #allocation3 [shape = 'u8[2048]{0}', space=vmem, size = 0x800, scoped, tag = 'output window, operand 0, single buffered']
    #allocation4 [shape = 's32[1]{0}', space=sflag, size = 0x4, scoped, tag = 'scoped memory for tpu_custom_call.1']
    %14 = vsyncpa [#allocation4], 0
    // Predicated region
    $region2: #{tpu_custom_call.1} parent=1 // pred_check
      _
    $region3: #{tpu_custom_call.1} parent=1 // pred_check_branch
      %16 = sbr.rel (0) target = $region5
    $region4: #{tpu_custom_call.1} parent=1 // pred_region
      _
    $region5: #{tpu_custom_call.1} parent=1 // pred_fallthru
      _
    // Predicated region
    $region6: #{tpu_custom_call.1} parent=1 // pred_check
      _
    $region7: #{tpu_custom_call.1} parent=1 // pred_check_branch
      %18 = sbr.rel (0) target = $region9
    $region8: #{tpu_custom_call.1} parent=1 // pred_region
      _
    $region9: #{tpu_custom_call.1} parent=1 // pred_fallthru
      _
    // Predicated region
    $region10: #{tpu_custom_call.1} parent=1 // pred_check
      _
    $region11: #{tpu_custom_call.1} parent=1 // pred_check_branch
      %20 = sbr.rel (0) target = $region13
    $region12: #{tpu_custom_call.1} parent=1 // pred_region
      _
    $region13: #{tpu_custom_call.1} parent=1 // pred_fallthru
      _
    // Predicated region
    $region14: #{tpu_custom_call.1} parent=1 // pred_check
      _
    $region15: #{tpu_custom_call.1} parent=1 // pred_check_branch
      %22 = sbr.rel (0) target = $region17
    $region16: #{tpu_custom_call.1} parent=1 // pred_region
      _
    $region17: #{tpu_custom_call.1} parent=1 // pred_fallthru
      _
    // Predicated region
    $region18: #{tpu_custom_call.1} parent=1 // pred_check
      _
    $region19: #{tpu_custom_call.1} parent=1 // pred_check_branch
      %24 = sbr.rel (0) target = $region21
    $region20: #{tpu_custom_call.1} parent=1 // pred_region
      _
    $region21: #{tpu_custom_call.1} parent=1 // pred_fallthru
      _
    // Predicated region
    $region22: #{tpu_custom_call.1} parent=1 // pred_check
      _
    $region23: #{tpu_custom_call.1} parent=1 // pred_check_branch
      %26 = sbr.rel (0) target = $region25
    $region24: #{tpu_custom_call.1} parent=1 // pred_region
      _
    $region25: #{tpu_custom_call.1} parent=1 // pred_fallthru
      _
    // Predicated region
    $region26: #{tpu_custom_call.1} parent=1 // pred_check
      _
    $region27: #{tpu_custom_call.1} parent=1 // pred_check_branch
      %28 = sbr.rel (0) target = $region29
    $region28: #{tpu_custom_call.1} parent=1 // pred_region
      _
    $region29: #{tpu_custom_call.1} parent=1 // pred_fallthru
      _
    %v29 = vld [vmem:[%s0] sm:$0xff]
    %v30 = vld [vmem:[%s1] sm:$0xff]
    %v31 = vld [vmem:[%s1 + $0x8] sm:$0xff]
    %v32 = vld [vmem:[%s3] sm:$0xff]
    %v33 = vld [vmem:[%s5] sm:$0x1]
    %35 = vset.pattern.permute.xlu0 0
    %36 = vperm.xlu0 %35, %v30
    %v37 = vpop.permute.xlu0 %36
    %40 = vset.pattern.permute.xlu0 0
    %41 = vperm.xlu0 %40, %v31
    %v42 = vpop.permute.xlu0 %41
    %v45 = vlaneseq
    %v46 = vshrl.u32 %v45, 7
    %v47 = vsub.s32 0, %v46
    %v48 = vrot.slane %v29, %v47
    %v49 = vlaneseq
    %v50 = vshrl.u32 %v49, 7
    %v51 = vsub.s32 2, %v50
    %v52 = vrot.slane %v29, %v51
    %v53 = vlaneseq
    %v54 = vshrl.u32 %v53, 7
    %v55 = vsub.s32 4, %v54
    %v56 = vrot.slane %v29, %v55
    %v57 = vlaneseq
    %v58 = vshrl.u32 %v57, 7
    %v59 = vsub.s32 6, %v58
    %v60 = vrot.slane %v29, %v59
    %v65 = vlaneseq
    %v66 = vshrl.u32 %v65, 7
    %v67 = vsub.s32 0, %v66
    %v68 = vrot.slane %v48, %v67
    %v69 = vlaneseq
    %v70 = vshrl.u32 %v69, 7
    %v71 = vsub.s32 0, %v70
    %v72 = vrot.slane %v52, %v71
    %v73 = vlaneseq
    %v74 = vshrl.u32 %v73, 7
    %v75 = vsub.s32 0, %v74
    %v76 = vrot.slane %v56, %v75
    %v77 = vlaneseq
    %v78 = vshrl.u32 %v77, 7
    %v79 = vsub.s32 0, %v78
    %v80 = vrot.slane %v60, %v79
    %v81 = vmul.f32 %v37, %v68
    %v82 = vmul.f32 %v37, %v72
    %v83 = vmul.f32 %v37, %v76
    %v84 = vmul.f32 %v37, %v80
    %v85 = vmul.f32 %v42, %v68
    %v86 = vmul.f32 %v42, %v72
    %v87 = vmul.f32 %v42, %v76
    %v88 = vmul.f32 %v42, %v80
    %89 = vset.pattern.permute.xlu0 1
    %90 = vperm.xlu0 %89, %v30
    %v91 = vpop.permute.xlu0 %90
    %93 = vset.pattern.permute.xlu0 1
    %94 = vperm.xlu0 %93, %v31
    %v95 = vpop.permute.xlu0 %94
    %v97 = vlaneseq
    %v98 = vshrl.u32 %v97, 7
    %v99 = vsub.s32 1, %v98
    %v100 = vrot.slane %v29, %v99
    %v101 = vlaneseq
    %v102 = vshrl.u32 %v101, 7
    %v103 = vsub.s32 3, %v102
    %v104 = vrot.slane %v29, %v103
    %v105 = vlaneseq
    %v106 = vshrl.u32 %v105, 7
    %v107 = vsub.s32 5, %v106
    %v108 = vrot.slane %v29, %v107
    %v109 = vlaneseq
    %v110 = vshrl.u32 %v109, 7
    %v111 = vsub.s32 7, %v110
    %v112 = vrot.slane %v29, %v111
    %v117 = vlaneseq
    %v118 = vshrl.u32 %v117, 7
    %v119 = vsub.s32 1, %v118
    %v120 = vrot.slane %v100, %v119
    %v121 = vlaneseq
    %v122 = vshrl.u32 %v121, 7
    %v123 = vsub.s32 1, %v122
    %v124 = vrot.slane %v104, %v123
    %v125 = vlaneseq
    %v126 = vshrl.u32 %v125, 7
    %v127 = vsub.s32 1, %v126
    %v128 = vrot.slane %v108, %v127
    %v129 = vlaneseq
    %v130 = vshrl.u32 %v129, 7
    %v131 = vsub.s32 1, %v130
    %v132 = vrot.slane %v112, %v131
    %v133 = vmul.f32 %v91, %v120
    %v134 = vmul.f32 %v91, %v124
    %v135 = vmul.f32 %v91, %v128
    %v136 = vmul.f32 %v91, %v132
    %v137 = vmul.f32 %v95, %v120
    %v138 = vmul.f32 %v95, %v124
    %v139 = vmul.f32 %v95, %v128
    %v140 = vmul.f32 %v95, %v132
    %v141 = vadd.f32 %v81, %v133
    %v142 = vadd.f32 %v82, %v134
    %v143 = vadd.f32 %v83, %v135
    %v144 = vadd.f32 %v84, %v136
    %v145 = vadd.f32 %v85, %v137
    %v146 = vadd.f32 %v86, %v138
    %v147 = vadd.f32 %v87, %v139
    %v148 = vadd.f32 %v88, %v140
    %v149 = vld [vmem:[%s2] sm:$0xff]
    %v150 = vld [vmem:[%s2 + $0x8] sm:$0xff]
    %152 = vset.pattern.permute.xlu0 0
    %153 = vperm.xlu0 %152, %v149
    %v154 = vpop.permute.xlu0 %153
    %157 = vset.pattern.permute.xlu0 0
    %158 = vperm.xlu0 %157, %v150
    %v159 = vpop.permute.xlu0 %158
    %v161 = vadd.f32 %v141, %v154
    %v162 = vadd.f32 %v142, %v154
    %v163 = vadd.f32 %v143, %v154
    %v164 = vadd.f32 %v144, %v154
    %v165 = vadd.f32 %v145, %v159
    %v166 = vadd.f32 %v146, %v159
    %v167 = vadd.f32 %v147, %v159
    %v168 = vadd.f32 %v148, %v159
    %v169 = vmax.f32 %v161, 0.0
    %v170 = vmax.f32 %v162, 0.0
    %v171 = vmax.f32 %v163, 0.0
    %v172 = vmax.f32 %v164, 0.0
    %v173 = vmax.f32 %v165, 0.0
    %v174 = vmax.f32 %v166, 0.0
    %v175 = vmax.f32 %v167, 0.0
    %v176 = vmax.f32 %v168, 0.0
    %178 = vset.pattern.permute.xlu0 0
    %179 = vperm.xlu0 %178, %v32
    %v180 = vpop.permute.xlu0 %179
    %v182 = vlaneseq
    %v183 = vshrl.u32 %v182, 7
    %v184 = vsub.s32 0, %v183
    %v185 = vrot.slane %v169, %v184
    %v186 = vlaneseq
    %v187 = vshrl.u32 %v186, 7
    %v188 = vsub.s32 0, %v187
    %v189 = vrot.slane %v170, %v188
    %v190 = vlaneseq
    %v191 = vshrl.u32 %v190, 7
    %v192 = vsub.s32 0, %v191
    %v193 = vrot.slane %v171, %v192
    %v194 = vlaneseq
    %v195 = vshrl.u32 %v194, 7
    %v196 = vsub.s32 0, %v195
    %v197 = vrot.slane %v172, %v196
    %v198 = vmul.f32 %v180, %v185
    %v199 = vmul.f32 %v180, %v189
    %v200 = vmul.f32 %v180, %v193
    %v201 = vmul.f32 %v180, %v197
    %202 = vset.pattern.permute.xlu0 1
    %203 = vperm.xlu0 %202, %v32
    %v204 = vpop.permute.xlu0 %203
    %v206 = vlaneseq
    %v207 = vshrl.u32 %v206, 7
    %v208 = vsub.s32 1, %v207
    %v209 = vrot.slane %v169, %v208
    %v210 = vlaneseq
    %v211 = vshrl.u32 %v210, 7
    %v212 = vsub.s32 1, %v211
    %v213 = vrot.slane %v170, %v212
    %v214 = vlaneseq
    %v215 = vshrl.u32 %v214, 7
    %v216 = vsub.s32 1, %v215
    %v217 = vrot.slane %v171, %v216
    %v218 = vlaneseq
    %v219 = vshrl.u32 %v218, 7
    %v220 = vsub.s32 1, %v219
    %v221 = vrot.slane %v172, %v220
    %v222 = vmul.f32 %v204, %v209
    %v223 = vmul.f32 %v204, %v213
    %v224 = vmul.f32 %v204, %v217
    %v225 = vmul.f32 %v204, %v221
    %v226 = vadd.f32 %v198, %v222
    %v227 = vadd.f32 %v199, %v223
    %v228 = vadd.f32 %v200, %v224
    %v229 = vadd.f32 %v201, %v225
    %230 = vset.pattern.permute.xlu0 2
    %231 = vperm.xlu0 %230, %v32
    %v232 = vpop.permute.xlu0 %231
    %v234 = vlaneseq
    %v235 = vshrl.u32 %v234, 7
    %v236 = vsub.s32 2, %v235
    %v237 = vrot.slane %v169, %v236
    %v238 = vlaneseq
    %v239 = vshrl.u32 %v238, 7
    %v240 = vsub.s32 2, %v239
    %v241 = vrot.slane %v170, %v240
    %v242 = vlaneseq
    %v243 = vshrl.u32 %v242, 7
    %v244 = vsub.s32 2, %v243
    %v245 = vrot.slane %v171, %v244
    %v246 = vlaneseq
    %v247 = vshrl.u32 %v246, 7
    %v248 = vsub.s32 2, %v247
    %v249 = vrot.slane %v172, %v248
    %v250 = vmul.f32 %v232, %v237
    %v251 = vmul.f32 %v232, %v241
    %v252 = vmul.f32 %v232, %v245
    %v253 = vmul.f32 %v232, %v249
    %v254 = vadd.f32 %v226, %v250
    %v255 = vadd.f32 %v227, %v251
    %v256 = vadd.f32 %v228, %v252
    %v257 = vadd.f32 %v229, %v253
    %258 = vset.pattern.permute.xlu0 3
    %259 = vperm.xlu0 %258, %v32
    %v260 = vpop.permute.xlu0 %259
    %v262 = vlaneseq
    %v263 = vshrl.u32 %v262, 7
    %v264 = vsub.s32 3, %v263
    %v265 = vrot.slane %v169, %v264
    %v266 = vlaneseq
    %v267 = vshrl.u32 %v266, 7
    %v268 = vsub.s32 3, %v267
    %v269 = vrot.slane %v170, %v268
    %v270 = vlaneseq
    %v271 = vshrl.u32 %v270, 7
    %v272 = vsub.s32 3, %v271
    %v273 = vrot.slane %v171, %v272
    %v274 = vlaneseq
    %v275 = vshrl.u32 %v274, 7
    %v276 = vsub.s32 3, %v275
    %v277 = vrot.slane %v172, %v276
    %v278 = vmul.f32 %v260, %v265
    %v279 = vmul.f32 %v260, %v269
    %v280 = vmul.f32 %v260, %v273
    %v281 = vmul.f32 %v260, %v277
    %v282 = vadd.f32 %v254, %v278
    %v283 = vadd.f32 %v255, %v279
    %v284 = vadd.f32 %v256, %v280
    %v285 = vadd.f32 %v257, %v281
    %286 = vset.pattern.permute.xlu0 4
    %287 = vperm.xlu0 %286, %v32
    %v288 = vpop.permute.xlu0 %287
    %v290 = vlaneseq
    %v291 = vshrl.u32 %v290, 7
    %v292 = vsub.s32 4, %v291
    %v293 = vrot.slane %v169, %v292
    %v294 = vlaneseq
    %v295 = vshrl.u32 %v294, 7
    %v296 = vsub.s32 4, %v295
    %v297 = vrot.slane %v170, %v296
    %v298 = vlaneseq
    %v299 = vshrl.u32 %v298, 7
    %v300 = vsub.s32 4, %v299
    %v301 = vrot.slane %v171, %v300
    %v302 = vlaneseq
    %v303 = vshrl.u32 %v302, 7
    %v304 = vsub.s32 4, %v303
    %v305 = vrot.slane %v172, %v304
    %v306 = vmul.f32 %v288, %v293
    %v307 = vmul.f32 %v288, %v297
    %v308 = vmul.f32 %v288, %v301
    %v309 = vmul.f32 %v288, %v305
    %v310 = vadd.f32 %v282, %v306
    %v311 = vadd.f32 %v283, %v307
    %v312 = vadd.f32 %v284, %v308
    %v313 = vadd.f32 %v285, %v309
    %314 = vset.pattern.permute.xlu0 5
    %315 = vperm.xlu0 %314, %v32
    %v316 = vpop.permute.xlu0 %315
    %v318 = vlaneseq
    %v319 = vshrl.u32 %v318, 7
    %v320 = vsub.s32 5, %v319
    %v321 = vrot.slane %v169, %v320
    %v322 = vlaneseq
    %v323 = vshrl.u32 %v322, 7
    %v324 = vsub.s32 5, %v323
    %v325 = vrot.slane %v170, %v324
    %v326 = vlaneseq
    %v327 = vshrl.u32 %v326, 7
    %v328 = vsub.s32 5, %v327
    %v329 = vrot.slane %v171, %v328
    %v330 = vlaneseq
    %v331 = vshrl.u32 %v330, 7
    %v332 = vsub.s32 5, %v331
    %v333 = vrot.slane %v172, %v332
    %v334 = vmul.f32 %v316, %v321
    %v335 = vmul.f32 %v316, %v325
    %v336 = vmul.f32 %v316, %v329
    %v337 = vmul.f32 %v316, %v333
    %v338 = vadd.f32 %v310, %v334
    %v339 = vadd.f32 %v311, %v335
    %v340 = vadd.f32 %v312, %v336
    %v341 = vadd.f32 %v313, %v337
    %342 = vset.pattern.permute.xlu0 6
    %343 = vperm.xlu0 %342, %v32
    %v344 = vpop.permute.xlu0 %343
    %v346 = vlaneseq
    %v347 = vshrl.u32 %v346, 7
    %v348 = vsub.s32 6, %v347
    %v349 = vrot.slane %v169, %v348
    %v350 = vlaneseq
    %v351 = vshrl.u32 %v350, 7
    %v352 = vsub.s32 6, %v351
    %v353 = vrot.slane %v170, %v352
    %v354 = vlaneseq
    %v355 = vshrl.u32 %v354, 7
    %v356 = vsub.s32 6, %v355
    %v357 = vrot.slane %v171, %v356
    %v358 = vlaneseq
    %v359 = vshrl.u32 %v358, 7
    %v360 = vsub.s32 6, %v359
    %v361 = vrot.slane %v172, %v360
    %v362 = vmul.f32 %v344, %v349
    %v363 = vmul.f32 %v344, %v353
    %v364 = vmul.f32 %v344, %v357
    %v365 = vmul.f32 %v344, %v361
    %v366 = vadd.f32 %v338, %v362
    %v367 = vadd.f32 %v339, %v363
    %v368 = vadd.f32 %v340, %v364
    %v369 = vadd.f32 %v341, %v365
    %370 = vset.pattern.permute.xlu0 7
    %371 = vperm.xlu0 %370, %v32
    %v372 = vpop.permute.xlu0 %371
    %v374 = vlaneseq
    %v375 = vshrl.u32 %v374, 7
    %v376 = vsub.s32 7, %v375
    %v377 = vrot.slane %v169, %v376
    %v378 = vlaneseq
    %v379 = vshrl.u32 %v378, 7
    %v380 = vsub.s32 7, %v379
    %v381 = vrot.slane %v170, %v380
    %v382 = vlaneseq
    %v383 = vshrl.u32 %v382, 7
    %v384 = vsub.s32 7, %v383
    %v385 = vrot.slane %v171, %v384
    %v386 = vlaneseq
    %v387 = vshrl.u32 %v386, 7
    %v388 = vsub.s32 7, %v387
    %v389 = vrot.slane %v172, %v388
    %v390 = vmul.f32 %v372, %v377
    %v391 = vmul.f32 %v372, %v381
    %v392 = vmul.f32 %v372, %v385
    %v393 = vmul.f32 %v372, %v389
    %v394 = vadd.f32 %v366, %v390
    %v395 = vadd.f32 %v367, %v391
    %v396 = vadd.f32 %v368, %v392
    %v397 = vadd.f32 %v369, %v393
    %398 = vset.pattern.permute.xlu0 8
    %399 = vperm.xlu0 %398, %v32
    %v400 = vpop.permute.xlu0 %399
    %v402 = vlaneseq
    %v403 = vshrl.u32 %v402, 7
    %v404 = vsub.s32 0, %v403
    %v405 = vrot.slane %v173, %v404
    %v406 = vlaneseq
    %v407 = vshrl.u32 %v406, 7
    %v408 = vsub.s32 0, %v407
    %v409 = vrot.slane %v174, %v408
    %v410 = vlaneseq
    %v411 = vshrl.u32 %v410, 7
    %v412 = vsub.s32 0, %v411
    %v413 = vrot.slane %v175, %v412
    %v414 = vlaneseq
    %v415 = vshrl.u32 %v414, 7
    %v416 = vsub.s32 0, %v415
    %v417 = vrot.slane %v176, %v416
    %v418 = vmul.f32 %v400, %v405
    %v419 = vmul.f32 %v400, %v409
    %v420 = vmul.f32 %v400, %v413
    %v421 = vmul.f32 %v400, %v417
    %v422 = vadd.f32 %v394, %v418
    %v423 = vadd.f32 %v395, %v419
    %v424 = vadd.f32 %v396, %v420
    %v425 = vadd.f32 %v397, %v421
    %426 = vset.pattern.permute.xlu0 9
    %427 = vperm.xlu0 %426, %v32
    %v428 = vpop.permute.xlu0 %427
    %v430 = vlaneseq
    %v431 = vshrl.u32 %v430, 7
    %v432 = vsub.s32 1, %v431
    %v433 = vrot.slane %v173, %v432
    %v434 = vlaneseq
    %v435 = vshrl.u32 %v434, 7
    %v436 = vsub.s32 1, %v435
    %v437 = vrot.slane %v174, %v436
    %v438 = vlaneseq
    %v439 = vshrl.u32 %v438, 7
    %v440 = vsub.s32 1, %v439
    %v441 = vrot.slane %v175, %v440
    %v442 = vlaneseq
    %v443 = vshrl.u32 %v442, 7
    %v444 = vsub.s32 1, %v443
    %v445 = vrot.slane %v176, %v444
    %v446 = vmul.f32 %v428, %v433
    %v447 = vmul.f32 %v428, %v437
    %v448 = vmul.f32 %v428, %v441
    %v449 = vmul.f32 %v428, %v445
    %v450 = vadd.f32 %v422, %v446
    %v451 = vadd.f32 %v423, %v447
    %v452 = vadd.f32 %v424, %v448
    %v453 = vadd.f32 %v425, %v449
    %454 = vset.pattern.permute.xlu0 10
    %455 = vperm.xlu0 %454, %v32
    %v456 = vpop.permute.xlu0 %455
    %v458 = vlaneseq
    %v459 = vshrl.u32 %v458, 7
    %v460 = vsub.s32 2, %v459
    %v461 = vrot.slane %v173, %v460
    %v462 = vlaneseq
    %v463 = vshrl.u32 %v462, 7
    %v464 = vsub.s32 2, %v463
    %v465 = vrot.slane %v174, %v464
    %v466 = vlaneseq
    %v467 = vshrl.u32 %v466, 7
    %v468 = vsub.s32 2, %v467
    %v469 = vrot.slane %v175, %v468
    %v470 = vlaneseq
    %v471 = vshrl.u32 %v470, 7
    %v472 = vsub.s32 2, %v471
    %v473 = vrot.slane %v176, %v472
    %v474 = vmul.f32 %v456, %v461
    %v475 = vmul.f32 %v456, %v465
    %v476 = vmul.f32 %v456, %v469
    %v477 = vmul.f32 %v456, %v473
    %v478 = vadd.f32 %v450, %v474
    %v479 = vadd.f32 %v451, %v475
    %v480 = vadd.f32 %v452, %v476
    %v481 = vadd.f32 %v453, %v477
    %482 = vset.pattern.permute.xlu0 11
    %483 = vperm.xlu0 %482, %v32
    %v484 = vpop.permute.xlu0 %483
    %v486 = vlaneseq
    %v487 = vshrl.u32 %v486, 7
    %v488 = vsub.s32 3, %v487
    %v489 = vrot.slane %v173, %v488
    %v490 = vlaneseq
    %v491 = vshrl.u32 %v490, 7
    %v492 = vsub.s32 3, %v491
    %v493 = vrot.slane %v174, %v492
    %v494 = vlaneseq
    %v495 = vshrl.u32 %v494, 7
    %v496 = vsub.s32 3, %v495
    %v497 = vrot.slane %v175, %v496
    %v498 = vlaneseq
    %v499 = vshrl.u32 %v498, 7
    %v500 = vsub.s32 3, %v499
    %v501 = vrot.slane %v176, %v500
    %v502 = vmul.f32 %v484, %v489
    %v503 = vmul.f32 %v484, %v493
    %v504 = vmul.f32 %v484, %v497
    %v505 = vmul.f32 %v484, %v501
    %v506 = vadd.f32 %v478, %v502
    %v507 = vadd.f32 %v479, %v503
    %v508 = vadd.f32 %v480, %v504
    %v509 = vadd.f32 %v481, %v505
    %510 = vset.pattern.permute.xlu0 12
    %511 = vperm.xlu0 %510, %v32
    %v512 = vpop.permute.xlu0 %511
    %v514 = vlaneseq
    %v515 = vshrl.u32 %v514, 7
    %v516 = vsub.s32 4, %v515
    %v517 = vrot.slane %v173, %v516
    %v518 = vlaneseq
    %v519 = vshrl.u32 %v518, 7
    %v520 = vsub.s32 4, %v519
    %v521 = vrot.slane %v174, %v520
    %v522 = vlaneseq
    %v523 = vshrl.u32 %v522, 7
    %v524 = vsub.s32 4, %v523
    %v525 = vrot.slane %v175, %v524
    %v526 = vlaneseq
    %v527 = vshrl.u32 %v526, 7
    %v528 = vsub.s32 4, %v527
    %v529 = vrot.slane %v176, %v528
    %v530 = vmul.f32 %v512, %v517
    %v531 = vmul.f32 %v512, %v521
    %v532 = vmul.f32 %v512, %v525
    %v533 = vmul.f32 %v512, %v529
    %v534 = vadd.f32 %v506, %v530
    %v535 = vadd.f32 %v507, %v531
    %v536 = vadd.f32 %v508, %v532
    %v537 = vadd.f32 %v509, %v533
    %538 = vset.pattern.permute.xlu0 13
    %539 = vperm.xlu0 %538, %v32
    %v540 = vpop.permute.xlu0 %539
    %v542 = vlaneseq
    %v543 = vshrl.u32 %v542, 7
    %v544 = vsub.s32 5, %v543
    %v545 = vrot.slane %v173, %v544
    %v546 = vlaneseq
    %v547 = vshrl.u32 %v546, 7
    %v548 = vsub.s32 5, %v547
    %v549 = vrot.slane %v174, %v548
    %v550 = vlaneseq
    %v551 = vshrl.u32 %v550, 7
    %v552 = vsub.s32 5, %v551
    %v553 = vrot.slane %v175, %v552
    %v554 = vlaneseq
    %v555 = vshrl.u32 %v554, 7
    %v556 = vsub.s32 5, %v555
    %v557 = vrot.slane %v176, %v556
    %v558 = vmul.f32 %v540, %v545
    %v559 = vmul.f32 %v540, %v549
    %v560 = vmul.f32 %v540, %v553
    %v561 = vmul.f32 %v540, %v557
    %v562 = vadd.f32 %v534, %v558
    %v563 = vadd.f32 %v535, %v559
    %v564 = vadd.f32 %v536, %v560
    %v565 = vadd.f32 %v537, %v561
    %566 = vset.pattern.permute.xlu0 14
    %567 = vperm.xlu0 %566, %v32
    %v568 = vpop.permute.xlu0 %567
    %v570 = vlaneseq
    %v571 = vshrl.u32 %v570, 7
    %v572 = vsub.s32 6, %v571
    %v573 = vrot.slane %v173, %v572
    %v574 = vlaneseq
    %v575 = vshrl.u32 %v574, 7
    %v576 = vsub.s32 6, %v575
    %v577 = vrot.slane %v174, %v576
    %v578 = vlaneseq
    %v579 = vshrl.u32 %v578, 7
    %v580 = vsub.s32 6, %v579
    %v581 = vrot.slane %v175, %v580
    %v582 = vlaneseq
    %v583 = vshrl.u32 %v582, 7
    %v584 = vsub.s32 6, %v583
    %v585 = vrot.slane %v176, %v584
    %v586 = vmul.f32 %v568, %v573
    %v587 = vmul.f32 %v568, %v577
    %v588 = vmul.f32 %v568, %v581
    %v589 = vmul.f32 %v568, %v585
    %v590 = vadd.f32 %v562, %v586
    %v591 = vadd.f32 %v563, %v587
    %v592 = vadd.f32 %v564, %v588
    %v593 = vadd.f32 %v565, %v589
    %594 = vset.pattern.permute.xlu0 15
    %595 = vperm.xlu0 %594, %v32
    %v596 = vpop.permute.xlu0 %595
    %v598 = vlaneseq
    %v599 = vshrl.u32 %v598, 7
    %v600 = vsub.s32 7, %v599
    %v601 = vrot.slane %v173, %v600
    %v602 = vlaneseq
    %v603 = vshrl.u32 %v602, 7
    %v604 = vsub.s32 7, %v603
    %v605 = vrot.slane %v174, %v604
    %v606 = vlaneseq
    %v607 = vshrl.u32 %v606, 7
    %v608 = vsub.s32 7, %v607
    %v609 = vrot.slane %v175, %v608
    %v610 = vlaneseq
    %v611 = vshrl.u32 %v610, 7
    %v612 = vsub.s32 7, %v611
    %v613 = vrot.slane %v176, %v612
    %v614 = vmul.f32 %v596, %v601
    %v615 = vmul.f32 %v596, %v605
    %v616 = vmul.f32 %v596, %v609
    %v617 = vmul.f32 %v596, %v613
    %v618 = vadd.f32 %v590, %v614
    %v619 = vadd.f32 %v591, %v615
    %v620 = vadd.f32 %v592, %v616
    %v621 = vadd.f32 %v593, %v617
    %v622 = vld [vmem:[%s4] sm:$0xff]
    %624 = vset.pattern.permute.xlu0 0
    %625 = vperm.xlu0 %624, %v622
    %v626 = vpop.permute.xlu0 %625
    %v628 = vadd.f32 %v618, %v626
    %v629 = vadd.f32 %v619, %v626
    %v630 = vadd.f32 %v620, %v626
    %v631 = vadd.f32 %v621, %v626
    %v632 = vmax.f32 %v628, 0.0
    %v633 = vmax.f32 %v629, 0.0
    %v634 = vmax.f32 %v630, 0.0
    %v635 = vmax.f32 %v631, 0.0
    %637 = vset.pattern.permute.xlu0 0
    %638 = vperm.xlu0 %637, %v33
    %v639 = vpop.permute.xlu0 %638
    %v641 = vlaneseq
    %v642 = vshrl.u32 %v641, 7
    %v643 = vsub.s32 0, %v642
    %v644 = vrot.slane %v639, %v643
    %v645 = vmul.f32 %v644, %v632
    %v646 = vmul.f32 %v644, %v633
    %v647 = vmul.f32 %v644, %v634
    %v648 = vmul.f32 %v644, %v635
    %649 = vset.pattern.permute.xlu0 1
    %650 = vperm.xlu0 %649, %v33
    %v651 = vpop.permute.xlu0 %650
    %v653 = vlaneseq
    %v654 = vshrl.u32 %v653, 7
    %v655 = vsub.s32 0, %v654
    %v656 = vrot.slane %v651, %v655
    %v657 = vmul.f32 %v656, %v632
    %v658 = vmul.f32 %v656, %v633
    %v659 = vmul.f32 %v656, %v634
    %v660 = vmul.f32 %v656, %v635
    %v665 = vrot.slane %v657, 1
    %v666 = vrot.slane %v658, 1
    %v667 = vrot.slane %v659, 1
    %v668 = vrot.slane %v660, 1
    %v673 = vadd.f32 %v645, %v665
    %v674 = vadd.f32 %v646, %v666
    %v675 = vadd.f32 %v647, %v667
    %v676 = vadd.f32 %v648, %v668
    %677 = vset.pattern.permute.xlu0 2
    %678 = vperm.xlu0 %677, %v33
    %v679 = vpop.permute.xlu0 %678
    %v681 = vlaneseq
    %v682 = vshrl.u32 %v681, 7
    %v683 = vsub.s32 0, %v682
    %v684 = vrot.slane %v679, %v683
    %v685 = vmul.f32 %v684, %v632
    %v686 = vmul.f32 %v684, %v633
    %v687 = vmul.f32 %v684, %v634
    %v688 = vmul.f32 %v684, %v635
    %v693 = vrot.slane %v685, 2
    %v694 = vrot.slane %v686, 2
    %v695 = vrot.slane %v687, 2
    %v696 = vrot.slane %v688, 2
    %v701 = vadd.f32 %v673, %v693
    %v702 = vadd.f32 %v674, %v694
    %v703 = vadd.f32 %v675, %v695
    %v704 = vadd.f32 %v676, %v696
    %705 = vset.pattern.permute.xlu0 3
    %706 = vperm.xlu0 %705, %v33
    %v707 = vpop.permute.xlu0 %706
    %v709 = vlaneseq
    %v710 = vshrl.u32 %v709, 7
    %v711 = vsub.s32 0, %v710
    %v712 = vrot.slane %v707, %v711
    %v713 = vmul.f32 %v712, %v632
    %v714 = vmul.f32 %v712, %v633
    %v715 = vmul.f32 %v712, %v634
    %v716 = vmul.f32 %v712, %v635
    %v721 = vrot.slane %v713, 3
    %v722 = vrot.slane %v714, 3
    %v723 = vrot.slane %v715, 3
    %v724 = vrot.slane %v716, 3
    %v729 = vadd.f32 %v701, %v721
    %v730 = vadd.f32 %v702, %v722
    %v731 = vadd.f32 %v703, %v723
    %v732 = vadd.f32 %v704, %v724
    %733 = vset.pattern.permute.xlu0 4
    %734 = vperm.xlu0 %733, %v33
    %v735 = vpop.permute.xlu0 %734
    %v737 = vlaneseq
    %v738 = vshrl.u32 %v737, 7
    %v739 = vsub.s32 0, %v738
    %v740 = vrot.slane %v735, %v739
    %v741 = vmul.f32 %v740, %v632
    %v742 = vmul.f32 %v740, %v633
    %v743 = vmul.f32 %v740, %v634
    %v744 = vmul.f32 %v740, %v635
    %v749 = vrot.slane %v741, 4
    %v750 = vrot.slane %v742, 4
    %v751 = vrot.slane %v743, 4
    %v752 = vrot.slane %v744, 4
    %v757 = vadd.f32 %v729, %v749
    %v758 = vadd.f32 %v730, %v750
    %v759 = vadd.f32 %v731, %v751
    %v760 = vadd.f32 %v732, %v752
    %761 = vset.pattern.permute.xlu0 5
    %762 = vperm.xlu0 %761, %v33
    %v763 = vpop.permute.xlu0 %762
    %v765 = vlaneseq
    %v766 = vshrl.u32 %v765, 7
    %v767 = vsub.s32 0, %v766
    %v768 = vrot.slane %v763, %v767
    %v769 = vmul.f32 %v768, %v632
    %v770 = vmul.f32 %v768, %v633
    %v771 = vmul.f32 %v768, %v634
    %v772 = vmul.f32 %v768, %v635
    %v777 = vrot.slane %v769, 5
    %v778 = vrot.slane %v770, 5
    %v779 = vrot.slane %v771, 5
    %v780 = vrot.slane %v772, 5
    %v785 = vadd.f32 %v757, %v777
    %v786 = vadd.f32 %v758, %v778
    %v787 = vadd.f32 %v759, %v779
    %v788 = vadd.f32 %v760, %v780
    %789 = vset.pattern.permute.xlu0 6
    %790 = vperm.xlu0 %789, %v33
    %v791 = vpop.permute.xlu0 %790
    %v793 = vlaneseq
    %v794 = vshrl.u32 %v793, 7
    %v795 = vsub.s32 0, %v794
    %v796 = vrot.slane %v791, %v795
    %v797 = vmul.f32 %v796, %v632
    %v798 = vmul.f32 %v796, %v633
    %v799 = vmul.f32 %v796, %v634
    %v800 = vmul.f32 %v796, %v635
    %v805 = vrot.slane %v797, 6
    %v806 = vrot.slane %v798, 6
    %v807 = vrot.slane %v799, 6
    %v808 = vrot.slane %v800, 6
    %v813 = vadd.f32 %v785, %v805
    %v814 = vadd.f32 %v786, %v806
    %v815 = vadd.f32 %v787, %v807
    %v816 = vadd.f32 %v788, %v808
    %817 = vset.pattern.permute.xlu0 7
    %818 = vperm.xlu0 %817, %v33
    %v819 = vpop.permute.xlu0 %818
    %v821 = vlaneseq
    %v822 = vshrl.u32 %v821, 7
    %v823 = vsub.s32 0, %v822
    %v824 = vrot.slane %v819, %v823
    %v825 = vmul.f32 %v824, %v632
    %v826 = vmul.f32 %v824, %v633
    %v827 = vmul.f32 %v824, %v634
    %v828 = vmul.f32 %v824, %v635
    %v833 = vrot.slane %v825, 7
    %v834 = vrot.slane %v826, 7
    %v835 = vrot.slane %v827, 7
    %v836 = vrot.slane %v828, 7
    %v841 = vadd.f32 %v813, %v833
    %v842 = vadd.f32 %v814, %v834
    %v843 = vadd.f32 %v815, %v835
    %v844 = vadd.f32 %v816, %v836
    %v845 = vld [vmem:[#allocation2] sm:$0x1]
    %847 = vset.pattern.permute.xlu0 0
    %848 = vperm.xlu0 %847, %v845
    %v849 = vpop.permute.xlu0 %848
    %v851 = vlaneseq
    %v852 = vshrl.u32 %v851, 7
    %v853 = vsub.s32 0, %v852
    %v854 = vrot.slane %v849, %v853
    %v855 = vadd.f32 %v841, %v854
    %v856 = vadd.f32 %v842, %v854
    %v857 = vadd.f32 %v843, %v854
    %v858 = vadd.f32 %v844, %v854
    %v863 = vcombine.low %v855, %v856
    %v864 = vcombine.low %v857, %v858
    %v866 = vunpack.c.l.s4 1966171168
    %v867 = vunpack.c.0.s8 %v866
    %v868 = vlaneseq
    %v869 = vshrl.u32 %v868, 7
    %v870 = vsub.s32 %v867, %v869
    %v871 = vrot.slane %v863, %v870
    %v873 = vunpack.c.l.s4 1966171168
    %v874 = vunpack.c.0.s8 %v873
    %v875 = vlaneseq
    %v876 = vshrl.u32 %v875, 7
    %v877 = vsub.s32 %v874, %v876
    %v878 = vrot.slane %v864, %v877
    %v879 = vcombine.low %v871, %v878
    %v881 = vunpack.c.l.s4 1966171168
    %v882 = vunpack.c.0.s8 %v881
    %v883 = vlaneseq
    %v884 = vshrl.u32 %v883, 7
    %v885 = vsub.s32 %v882, %v884
    %v886 = vrot.slane %v879, %v885
    %v888 = vlaneseq
    %vm889 = vcmp.ge.s32.totalorder %v888, 0
    %vm890 = vcmp.lt.s32.totalorder %v888, 512
    %vm891 = vmand %vm889, %vm890
    %892 = vst.msk [vmem:[#allocation3] sm:$0xf] %vm891, %v886
    // Predicated region
    $region30: #{tpu_custom_call.1} parent=1 // pred_check
      _
    $region31: #{tpu_custom_call.1} parent=1 // pred_check_branch
      %894 = sbr.rel (0) target = $region33
    $region32: #{tpu_custom_call.1} parent=1 // pred_region
      %s896 = ssub.s32 64, 64
      %897 = vsyncadd [#allocation4], %s896
      %s899 = sshll.u32 [#allocation3], 4
      %s900 = int_to_ptr.vmem [resolvable:$true] %s899
      %902 = dma.vmem_to_hbm [thread:$0]  %s900, 64, %s7, [#allocation4]
    $region33: #{tpu_custom_call.1} parent=1 // pred_fallthru
      _
    // Predicated region
    $region34: #{tpu_custom_call.1} parent=1 // pred_check
      _
    $region35: #{tpu_custom_call.1} parent=1 // pred_check_branch
      %904 = sbr.rel (0) target = $region37
    $region36: #{tpu_custom_call.1} parent=1 // pred_region
      %905 = dma.done [#allocation4], 64
    $region37: #{tpu_custom_call.1} parent=1 // pred_fallthru
      _
    %906 = vsyncpa [#allocation4], 1

</llo_original>
